<compile_context>
chip_gen: v7x
topology: tpu7x:2x2x1
jax: 0.10.0
libtpu: 0.0.40
codegen_flags: <defaults>
</compile_context>

<pallas_src>
import jax
import jax.numpy as jnp
from jax.experimental import pallas as pl
from jax.experimental.pallas import tpu as pltpu


def _noise_add_kernel(w_ref, img_ref, noise_ref, out_ref):
    # w_ref: SMEM (1,) f32 | img_ref: VMEM (1, TC, THW) | noise_ref: VMEM (1, 1, THW)
    w = w_ref[0]
    out_ref[...] = (img_ref[...] + w * noise_ref[...]).astype(out_ref.dtype)


def _pick_tiles(C, HW, itemsize, target_bytes=2 << 20):
    """Tile sizes for (C, HW): (8,128)-aligned (or the full dim), ~target_bytes/block."""
    # Lane tile: multiple of 128 that divides HW, as wide as the budget allows
    # assuming >= 8 sublane rows; otherwise take the full dim.
    if HW % 128 == 0:
        cap = max(128, (target_bytes // (8 * itemsize)) // 128 * 128)
        thw = min(HW, cap)
        while HW % thw:
            thw -= 128
    else:
        thw = HW
    # Sublane (channel) tile: multiple of 8 that divides C, filling the budget;
    # otherwise the full dim (e.g. C=4 -> full dim, which is a legal layout).
    if C % 8 == 0:
        cap_rows = max(8, (target_bytes // (thw * itemsize)) // 8 * 8)
        tc = min(C, cap_rows)
        while C % tc:
            tc -= 8
    else:
        tc = C
    return tc, thw


def noise_injection(image, weight, noise=None, *, key=None):
    """image: (B, C, H, W); weight: scalar / (1,); noise: (B, 1, H, W) or None."""
    B, C, H, W = image.shape
    HW = H * W

    if noise is None:
        # Matches torch: noise = image.new_empty(B, 1, H, W).normal_()
        # TODO(synk): require an explicit key in training code; the default key
        # makes the injected noise deterministic and identical across calls.
        if key is None:
            key = jax.random.PRNGKey(0)
        noise = jax.random.normal(key, (B, 1, H, W), dtype=jnp.float32)

    img_flat = image.reshape(B, C, HW)
    noise_flat = noise.reshape(B, 1, HW).astype(image.dtype)
    weight = jnp.asarray(weight, dtype=jnp.float32).reshape(1)

    tc, thw = _pick_tiles(C, HW, jnp.dtype(image.dtype).itemsize)
    grid = (B, C // tc, HW // thw)

    out = pl.pallas_call(
        _noise_add_kernel,
        out_shape=jax.ShapeDtypeStruct((B, C, HW), image.dtype),
        grid_spec=pl.GridSpec(
            grid=grid,
            in_specs=[
                pl.BlockSpec(memory_space=pltpu.MemorySpace.SMEM),       # weight
                pl.BlockSpec((1, tc, thw), lambda b, c, s: (b, c, s)),   # image
                pl.BlockSpec((1, 1, thw), lambda b, c, s: (b, 0, s)),    # noise (bcast C)
            ],
            out_specs=pl.BlockSpec((1, tc, thw), lambda b, c, s: (b, c, s)),
        ),
        compiler_params=pltpu.CompilerParams(
            dimension_semantics=("parallel", "parallel", "parallel"),
            vmem_limit_bytes=32 << 20,
        ),
    )(weight, img_flat, noise_flat)

    return out.reshape(B, C, H, W)


if __name__ == "__main__":
    key = jax.random.PRNGKey(0)
    k_img, k_noise, k_seed = jax.random.split(key, 3)

    B, C, H, W = 2, 4, 16, 16
    image = jax.random.normal(k_img, (B, C, H, W), dtype=jnp.float32)
    noise = jax.random.normal(k_noise, (B, 1, H, W), dtype=jnp.float32)

    weight_zero = jnp.zeros((1,), dtype=jnp.float32)   # nn.Parameter(torch.zeros(1))
    weight_nz = jnp.array([0.5], dtype=jnp.float32)

    # --- explicit-noise path: must match the reference exactly --------------
    out0 = jax.block_until_ready(noise_injection(image, weight_zero, noise))
    out1 = jax.block_until_ready(noise_injection(image, weight_nz, noise))
    ref0 = image + weight_zero[0] * noise
    ref1 = image + weight_nz[0] * noise
    assert out0.shape == (B, C, H, W) and out0.dtype == jnp.float32
    assert jnp.allclose(out0, ref0, atol=1e-6)
    assert jnp.allclose(out1, ref1, atol=1e-6)

    # --- noise=None path: noise drawn in the wrapper, same add kernel -------
    out_rng0 = jax.block_until_ready(noise_injection(image, weight_zero, key=k_seed))
    out_rng1 = jax.block_until_ready(noise_injection(image, weight_nz, key=k_seed))
    # weight == 0 -> identity regardless of the generated noise.
    assert jnp.allclose(out_rng0, image, atol=1e-6)
    # Recovered noise must be identical across channels (broadcast over C) and
    # roughly standard-normal.
    inj = (out_rng1 - image) / 0.5
    assert jnp.allclose(inj, inj[:, :1], atol=1e-5)
    assert abs(float(inj.mean())) < 0.3
    assert 0.5 < float(inj.std()) < 1.5

    print("KERNEL_OK")
</pallas_src>

<mosaic_0001>
module attributes {stable_mosaic.version = 11 : i64} {
  func.func @_noise_add_kernel(%arg0: i32, %arg1: i32, %arg2: i32, %arg3: memref<1xf32, #tpu.memory_space<smem>>, %arg4: memref<1x4x256xf32, #tpu.memory_space<vmem>>, %arg5: memref<1x1x256xf32, #tpu.memory_space<vmem>>, %arg6: memref<1x4x256xf32, #tpu.memory_space<vmem>>) attributes {dimension_semantics = [#tpu.dimension_semantics<parallel>, #tpu.dimension_semantics<parallel>, #tpu.dimension_semantics<parallel>], iteration_bounds = array<i64: 2, 1, 1>, scalar_prefetch = 0 : i64, scratch_operands = 0 : i64, tpu.core_type = #tpu.core_type<tc>, window_params = [{transform_indices = @transform_0, window_bounds = array<i64: 1>}, {transform_indices = @transform_1, window_bounds = array<i64: 1, 4, 256>}, {transform_indices = @transform_2, window_bounds = array<i64: 1, 1, 256>}, {transform_indices = @transform_3, window_bounds = array<i64: 1, 4, 256>}]} {
    %c0 = arith.constant 0 : index
    %0 = memref.load %arg3[%c0] : memref<1xf32, #tpu.memory_space<smem>>
    %c0_0 = arith.constant 0 : index
    %c0_1 = arith.constant 0 : index
    %c0_2 = arith.constant 0 : index
    %1 = vector.load %arg4[%c0_0, %c0_1, %c0_2] : memref<1x4x256xf32, #tpu.memory_space<vmem>>, vector<1x4x256xf32>
    %c0_3 = arith.constant 0 : index
    %c0_4 = arith.constant 0 : index
    %c0_5 = arith.constant 0 : index
    %2 = vector.load %arg5[%c0_3, %c0_4, %c0_5] : memref<1x1x256xf32, #tpu.memory_space<vmem>>, vector<1x1x256xf32>
    %3 = vector.broadcast %0 : f32 to vector<1x1x256xf32>
    %4 = arith.mulf %3, %2 : vector<1x1x256xf32>
    %5 = vector.broadcast %4 : vector<1x1x256xf32> to vector<1x4x256xf32>
    %6 = arith.addf %1, %5 : vector<1x4x256xf32>
    %c0_6 = arith.constant 0 : index
    %c0_7 = arith.constant 0 : index
    %c0_8 = arith.constant 0 : index
    %7 = vector.load %arg6[%c0_6, %c0_7, %c0_8] : memref<1x4x256xf32, #tpu.memory_space<vmem>>, vector<1x4x256xf32>
    tpu.vector_store %arg6[%c0_6, %c0_7, %c0_8], %6 {strides = array<i32>} : memref<1x4x256xf32, #tpu.memory_space<vmem>>, vector<1x4x256xf32>,
    return
  }
  func.func @transform_0(%arg0: i32, %arg1: i32, %arg2: i32) -> i32 {
    %c0_i32 = arith.constant 0 : i32
    %c0_i32_0 = arith.constant 0 : i32
    return %c0_i32 : i32
  }
  func.func @transform_1(%arg0: i32, %arg1: i32, %arg2: i32) -> (i32, i32, i32) {
    %c0_i32 = arith.constant 0 : i32
    return %arg0, %arg1, %arg2 : i32, i32, i32
  }
  func.func @transform_2(%arg0: i32, %arg1: i32, %arg2: i32) -> (i32, i32, i32) {
    %c0_i32 = arith.constant 0 : i32
    %c0_i32_0 = arith.constant 0 : i32
    return %arg0, %c0_i32, %arg2 : i32, i32, i32
  }
  func.func @transform_3(%arg0: i32, %arg1: i32, %arg2: i32) -> (i32, i32, i32) {
    %c0_i32 = arith.constant 0 : i32
    return %arg0, %arg1, %arg2 : i32, i32, i32
  }
}

</mosaic_0001>

<llo_original>
// kernel: tpu_custom_call.1
$region0: #{tpu_custom_call.1}
  #allocation0 [shape = 'u32[]', space=smem, size = 0x4, offset = 0x4, fixed_abs, tag = 'smem constant byte address 0x4 - core index']
  #allocation1 [shape = 'u32[144,128]{1,0:T(1,128)}', space=vmem, size = 0x12000, scoped, tag = 'internal scratch']
  #allocation2 [shape = 'f32[1]{0:T(128)S(6)}', space=smem, size = 0x200, scoped, tag = 'scoped memory for tpu_custom_call.1']
  %s0 = inlined_call_operand.<no memory space> [shape: f32[1], index: 0, kind: input, shape index: {}]
  %s1 = inlined_call_operand.hbm [shape: f32[2,4,256], index: 1, kind: input, shape index: {}]
  %s2 = inlined_call_operand.vmem [shape: f32[2,1,256], index: 2, kind: input, shape index: {}]
  %s3 = inlined_call_operand.hbm [shape: f32[2,4,256], index: 3, kind: output, shape index: {}]
  %s4 = sld [smem:[#allocation0]]
  $region49: #{tpu_custom_call.1} parent=0
    _
  %s6 = ssub.s32 1, %s4
  %s7 = scalar_select 0, %s6, %s4
  %8 = sst [smem:[#allocation2]] %s0
  $region1: #{tpu_custom_call.1} parent=0
    #allocation3 [shape = 'u8[8192]{0}', space=vmem, size = 0x2000, scoped, tag = 'input window, operand 1']
    #allocation4 [shape = 's32[2]{0}', space=sflag, size = 0x8, scoped, tag = 'scoped memory for tpu_custom_call.1']
    #allocation5 [shape = 's32[2]{0}', space=sflag, size = 0x8, scoped, tag = 'scoped memory for tpu_custom_call.1']
    #allocation6 [shape = 'u8[8192]{0}', space=vmem, size = 0x2000, scoped, tag = 'output window, operand 0']
    %9 = vsyncpa [#allocation4], 0
    %s10 = scalar_lea.sflag [#allocation4], 1
    %11 = vsyncpa %s10, 0
    %12 = vsyncpa [#allocation5], 0
    %s13 = scalar_lea.sflag [#allocation5], 1
    %14 = vsyncpa %s13, 0
    loop: start=0, step=1, limit=4
    $region2: #{tpu_custom_call.1} parent=1 // loop_pre_header
      _
    $region3: #{tpu_custom_call.1} parent=1 // loop_header
      %s16 = sphi 0, %s20
      %p17 = scmp.ge.s32.totalorder %s16, 4
      %s23 = sphi 0, %s42
      %s24 = sphi 0, %s38
      %s25 = sphi 0, %s34
      %s26 = sphi 0, %s23
      %s27 = sphi 0, %s24
      %s28 = sphi 0, %s25
      %s29 = sphi 0, %s26
      %s30 = sphi 0, %s27
      %s31 = sphi 0, %s28
      %s43 = sphi 0, %s43
      %s45 = sphi 0, %s43
      %s46 = sphi 0, %s45
      %s60 = sphi 0, %s46
      %s70 = sphi 0, %s72
      %s73 = sphi 0, %s70
      %s74 = sphi 0, %s73
      %s90 = sphi 0, %s74
      %s98 = sphi 0, %s100
      %s101 = sphi 0, %s98
      %s102 = sphi 0, %s101
      %s118 = sphi 0, %s102
      %s128 = sphi 0, %s130
      %s131 = sphi 0, %s128
      %s132 = sphi 0, %s131
      %s148 = sphi 0, %s132
    $region4: #{tpu_custom_call.1} parent=1 // loop_header_branch
      %19 = sbr.rel (%p17) target = $region8
    $region5: #{tpu_custom_call.1} parent=1 // loop_body
      %s21 = ssub.s32 %s16, 1
      %s22 = ssub.s32 %s16, 2
      %s32 = sadd.s32 1, %s25
      %p33 = scmp.ge.s32.totalorder %s32, 1
      %s34 = scalar_select %p33, 0, %s32
      %s35 = sadd.s32 1, %s24
      %s36 = scalar_select %p33, %s35, %s24
      %p37 = scmp.ge.s32.totalorder %s36, 1
      %s38 = scalar_select %p37, 0, %s36
      %s39 = sadd.s32 1, %s23
      %s40 = scalar_select %p37, %s39, %s23
      %p41 = scmp.ge.s32.totalorder %s40, 2
      %s42 = scalar_select %p41, 0, %s40
      %s44 = sadd.s32 %s43, 1
      %p47 = scmp.eq.s32.totalorder %s16, 1
      %p48 = scmp.ne.s32.totalorder %s43, %s45
      %p49 = scmp.eq.s32.totalorder %s16, 0
      %p50 = por %p48, %p49
      %p51 = scmp.ne.s32.totalorder %s43, %s45
      %p52 = scmp.eq.s32.totalorder %s21, 1
      %p53 = por %p51, %p52
      %p54 = scmp.ne.s32.totalorder %s45, %s46
      %p55 = scmp.eq.s32.totalorder %s21, 0
      %p56 = por %p54, %p55
      %p57 = scmp.ne.s32.totalorder %s45, %s46
      %p58 = scmp.eq.s32.totalorder %s22, 1
      %p59 = por %p57, %p58
      %p61 = scmp.ne.s32.totalorder %s46, %s60
      %p62 = scmp.eq.s32.totalorder %s22, 0
      %p63 = por %p61, %p62
      %s64 = ssub.s32 %s23, %s42
      %s65 = ssub.s32 %s24, %s38
      %s66 = sor.u32 %s64, %s65
      %s67 = ssub.s32 %s25, %s34
      %s68 = sor.u32 %s66, %s67
      %p69 = scmp.eq.s32.totalorder %s68, 0
      %s71 = sadd.s32 %s70, 1
      %s72 = scalar_select %p69, %s70, %s71
      %p75 = pneg %p69
      %p76 = scmp.eq.s32.totalorder %s16, 1
      %p77 = por %p75, %p76
      %p78 = scmp.ne.s32.totalorder %s70, %s73
      %p79 = scmp.eq.s32.totalorder %s16, 0
      %p80 = por %p78, %p79
      %p81 = scmp.ne.s32.totalorder %s70, %s73
      %p82 = scmp.eq.s32.totalorder %s21, 1
      %p83 = por %p81, %p82
      %p84 = scmp.ne.s32.totalorder %s73, %s74
      %p85 = scmp.eq.s32.totalorder %s21, 0
      %p86 = por %p84, %p85
      %p87 = scmp.ne.s32.totalorder %s73, %s74
      %p88 = scmp.eq.s32.totalorder %s22, 1
      %p89 = por %p87, %p88
      %p91 = scmp.ne.s32.totalorder %s74, %s90
      %p92 = scmp.eq.s32.totalorder %s22, 0
      %p93 = por %p91, %p92
      %s94 = ssub.s32 %s23, %s42
      %s95 = ssub.s32 %s25, %s34
      %s96 = sor.u32 %s94, %s95
      %p97 = scmp.eq.s32.totalorder %s96, 0
      %s99 = sadd.s32 %s98, 1
      %s100 = scalar_select %p97, %s98, %s99
      %p103 = pneg %p97
      %p104 = scmp.eq.s32.totalorder %s16, 1
      %p105 = por %p103, %p104
      %p106 = scmp.ne.s32.totalorder %s98, %s101
      %p107 = scmp.eq.s32.totalorder %s16, 0
      %p108 = por %p106, %p107
      %p109 = scmp.ne.s32.totalorder %s98, %s101
      %p110 = scmp.eq.s32.totalorder %s21, 1
      %p111 = por %p109, %p110
      %p112 = scmp.ne.s32.totalorder %s101, %s102
      %p113 = scmp.eq.s32.totalorder %s21, 0
      %p114 = por %p112, %p113
      %p115 = scmp.ne.s32.totalorder %s101, %s102
      %p116 = scmp.eq.s32.totalorder %s22, 1
      %p117 = por %p115, %p116
      %p119 = scmp.ne.s32.totalorder %s102, %s118
      %p120 = scmp.eq.s32.totalorder %s22, 0
      %p121 = por %p119, %p120
      %s122 = ssub.s32 %s23, %s42
      %s123 = ssub.s32 %s24, %s38
      %s124 = sor.u32 %s122, %s123
      %s125 = ssub.s32 %s25, %s34
      %s126 = sor.u32 %s124, %s125
      %p127 = scmp.eq.s32.totalorder %s126, 0
      %s129 = sadd.s32 %s128, 1
      %s130 = scalar_select %p127, %s128, %s129
      %p133 = pneg %p127
      %p134 = scmp.eq.s32.totalorder %s16, 1
      %p135 = por %p133, %p134
      %p136 = scmp.ne.s32.totalorder %s128, %s131
      %p137 = scmp.eq.s32.totalorder %s16, 0
      %p138 = por %p136, %p137
      %p139 = scmp.ne.s32.totalorder %s128, %s131
      %p140 = scmp.eq.s32.totalorder %s21, 1
      %p141 = por %p139, %p140
      %p142 = scmp.ne.s32.totalorder %s131, %s132
      %p143 = scmp.eq.s32.totalorder %s21, 0
      %p144 = por %p142, %p143
      %p145 = scmp.ne.s32.totalorder %s131, %s132
      %p146 = scmp.eq.s32.totalorder %s22, 1
      %p147 = por %p145, %p146
      %p149 = scmp.ne.s32.totalorder %s132, %s148
      %p150 = scmp.eq.s32.totalorder %s22, 0
      %p151 = por %p149, %p150
      %p152 = scmp.le.s32.totalorder 1, %s16
      %p153 = scmp.lt.s32.totalorder %s16, 3
      %p154 = pnand %p152, %p153
      %p155 = pneg %p154
      // Predicated region
      $region9: #{tpu_custom_call.1} parent=5 // pred_check
        _
      $region10: #{tpu_custom_call.1} parent=5 // pred_check_branch
        %157 = sbr.rel (%p154) target = $region12
      $region11: #{tpu_custom_call.1} parent=5 // pred_region
        %s158 = ssub.s32 %s16, 1
        // Predicated region
        $region13: #{tpu_custom_call.1} parent=11 // pred_check
          %p159 = pneg %p56
        $region14: #{tpu_custom_call.1} parent=11 // pred_check_branch
          %161 = sbr.rel (%p159) target = $region16
        $region15: #{tpu_custom_call.1} parent=11 // pred_region
          _
        $region16: #{tpu_custom_call.1} parent=11 // pred_fallthru
          _
      $region12: #{tpu_custom_call.1} parent=5 // pred_fallthru
        _
      %p162 = scmp.lt.s32.totalorder %s16, 2
      // Predicated region
      $region17: #{tpu_custom_call.1} parent=5 // pred_check
        %p163 = pneg %p162
      $region18: #{tpu_custom_call.1} parent=5 // pred_check_branch
        %165 = sbr.rel (%p163) target = $region20
      $region19: #{tpu_custom_call.1} parent=5 // pred_region
        // Predicated region
        $region21: #{tpu_custom_call.1} parent=19 // pred_check
          %p166 = pneg %p80
        $region22: #{tpu_custom_call.1} parent=19 // pred_check_branch
          %168 = sbr.rel (%p166) target = $region24
        $region23: #{tpu_custom_call.1} parent=19 // pred_region
          %s169 = sand.u32 %s70, 1
          %s170 = scalar_lea.sflag [#allocation4], %s169
          %s171 = sand.u32 %s70, 1
          %s172 = smul.addr %s171, 8
          %s173 = scalar_lea.vmem [#allocation3], %s172
          %s174 = smul.u32 2, %s25
          %s176 = ssub.s32 128, 128
          %177 = vsyncadd %s170, %s176
          %s178 = smul.addr %s24, 2
          %s179 = sadd.s32 %s174, %s178
          %s180 = smul.addr %s23, 2
          %s181 = sadd.s32 %s179, %s180
          %s182 = smul.addr %s181, 64
          %s183 = scalar_lea.hbm %s1, %s182
          %s185 = sshll.u32 %s173, 4
          %s186 = int_to_ptr.vmem [resolvable:$true] %s185
          %188 = dma.hbm_to_vmem [thread:$0]  %s183, 128, %s186, %s170
        $region24: #{tpu_custom_call.1} parent=19 // pred_fallthru
          _
        // Predicated region
        $region25: #{tpu_custom_call.1} parent=19 // pred_check
          %p189 = pneg %p108
        $region26: #{tpu_custom_call.1} parent=19 // pred_check_branch
          %191 = sbr.rel (%p189) target = $region28
        $region27: #{tpu_custom_call.1} parent=19 // pred_region
          %s192 = smul.u32 2, %s25
          %p193 = scmp.lt.s32.totalorder %s23, 1
          %s194 = scalar_select %p193, %s23, 1
          %p195 = scmp.lt.s32.totalorder %s192, 1
          %s196 = scalar_select %p195, %s192, 1
          %s197 = smul.addr %s194, 2
          %s198 = sadd.s32 %s196, %s197
          %s199 = scalar_lea.vmem %s2, %s198
          %s200 = smul.u32 2, %s25
        $region28: #{tpu_custom_call.1} parent=19 // pred_fallthru
          _
      $region20: #{tpu_custom_call.1} parent=5 // pred_fallthru
        _
      %p201 = scmp.le.s32.totalorder 1, %s16
      %p202 = scmp.lt.s32.totalorder %s16, 3
      %p203 = pnand %p201, %p202
      %p204 = pneg %p203
      // Predicated region
      $region29: #{tpu_custom_call.1} parent=5 // pred_check
        _
      $region30: #{tpu_custom_call.1} parent=5 // pred_check_branch
        %206 = sbr.rel (%p203) target = $region32
      $region31: #{tpu_custom_call.1} parent=5 // pred_region
        %s207 = ssub.s32 %s16, 1
        %s208 = sand.u32 %s73, 1
        %s209 = scalar_lea.sflag [#allocation4], %s208
        %s210 = sand.u32 %s73, 1
        %s211 = smul.addr %s210, 8
        %s212 = scalar_lea.vmem [#allocation3], %s211
        // Predicated region
        $region33: #{tpu_custom_call.1} parent=31 // pred_check
          %p213 = pneg %p86
        $region34: #{tpu_custom_call.1} parent=31 // pred_check_branch
          %215 = sbr.rel (%p213) target = $region36
        $region35: #{tpu_custom_call.1} parent=31 // pred_region
          %216 = dma.done %s209, 128
        $region36: #{tpu_custom_call.1} parent=31 // pred_fallthru
          _
        %p217 = pneg %p56
        %p218 = pneg %p53
        %s219 = sand.u32 %s73, 1
        %s220 = scalar_lea.sflag [#allocation4], %s219
        %s221 = sand.u32 %s73, 1
        %s222 = smul.addr %s221, 8
        %s223 = scalar_lea.vmem [#allocation3], %s222
        %p224 = pneg %p86
        %p225 = pneg %p83
        %s226 = smul.u32 2, %s28
        %p227 = scmp.lt.s32.totalorder %s26, 1
        %s228 = scalar_select %p227, %s26, 1
        %p229 = scmp.lt.s32.totalorder %s226, 1
        %s230 = scalar_select %p229, %s226, 1
        %s231 = smul.addr %s228, 2
        %s232 = sadd.s32 %s230, %s231
        %s233 = scalar_lea.vmem %s2, %s232
        %p234 = pneg %p114
        %p235 = pneg %p111
        %p236 = pneg %p144
        %p237 = pneg %p141
        %s238 = sand.u32 %s131, 1
        %s239 = scalar_lea.sflag [#allocation5], %s238
        %s240 = sand.u32 %s131, 1
        %s241 = smul.addr %s240, 8
        %s242 = scalar_lea.vmem [#allocation6], %s241
        %s243 = smul.u32 2, %s28
        %s244 = smul.u32 2, %s28
        %p245 = scmp.lt.s32.totalorder %s26, 1
        %s246 = scalar_select %p245, %s26, 1
        %p247 = scmp.lt.s32.totalorder %s244, 1
        %s248 = scalar_select %p247, %s244, 1
        %s249 = smul.addr %s246, 2
        %s250 = sadd.s32 %s248, %s249
        %s251 = scalar_lea.vmem %s2, %s250
        %s252 = smul.u32 2, %s28
        %s253 = smul.u32 2, %s28
        %s254 = sld [smem:[#allocation2]]
        %v255 = vld [vmem:[%s212] sm:$0xff]
        %v256 = vld [vmem:[%s251] sm:$0x3]
        %v257 = vstv %s254
        %v258 = vmul.f32 %v257, %v256
        %v260 = vlaneseq
        %v261 = vshrl.u32 %v260, 7
        %v262 = vsub.s32 0, %v261
        %v263 = vrot.slane %v258, %v262
        %v264 = vlaneseq
        %v265 = vshrl.u32 %v264, 7
        %v266 = vsub.s32 1, %v265
        %v267 = vrot.slane %v258, %v266
        %v268 = vcombine.low %v263, %v267
        %v270 = vadd.f32 %v255, %v268
        %271 = vst [vmem:[%s242] sm:$0xff] %v270
        %s272 = sand.u32 %s131, 1
        %s273 = scalar_lea.sflag [#allocation5], %s272
        %s274 = sand.u32 %s131, 1
        %s275 = smul.addr %s274, 8
        %s276 = scalar_lea.vmem [#allocation6], %s275
        // Predicated region
        $region37: #{tpu_custom_call.1} parent=31 // pred_check
          %p277 = pneg %p141
        $region38: #{tpu_custom_call.1} parent=31 // pred_check_branch
          %279 = sbr.rel (%p277) target = $region40
        $region39: #{tpu_custom_call.1} parent=31 // pred_region
          %s280 = smul.u32 2, %s28
          %s282 = ssub.s32 128, 128
          %283 = vsyncadd %s273, %s282
          %s284 = smul.addr %s27, 2
          %s285 = sadd.s32 %s280, %s284
          %s286 = smul.addr %s26, 2
          %s287 = sadd.s32 %s285, %s286
          %s288 = smul.addr %s287, 64
          %s289 = scalar_lea.hbm %s3, %s288
          %s291 = sshll.u32 %s276, 4
          %s292 = int_to_ptr.vmem [resolvable:$true] %s291
          %294 = dma.vmem_to_hbm [thread:$0]  %s292, 128, %s289, %s273
        $region40: #{tpu_custom_call.1} parent=31 // pred_fallthru
          _
      $region32: #{tpu_custom_call.1} parent=5 // pred_fallthru
        _
      %p295 = scmp.le.s32.totalorder 2, %s16
      // Predicated region
      $region41: #{tpu_custom_call.1} parent=5 // pred_check
        %p296 = pneg %p295
      $region42: #{tpu_custom_call.1} parent=5 // pred_check_branch
        %298 = sbr.rel (%p296) target = $region44
      $region43: #{tpu_custom_call.1} parent=5 // pred_region
        %s299 = ssub.s32 %s16, 2
        // Predicated region
        $region45: #{tpu_custom_call.1} parent=43 // pred_check
          %p300 = pneg %p147
        $region46: #{tpu_custom_call.1} parent=43 // pred_check_branch
          %302 = sbr.rel (%p300) target = $region48
        $region47: #{tpu_custom_call.1} parent=43 // pred_region
          %s303 = sand.u32 %s132, 1
          %s304 = scalar_lea.sflag [#allocation5], %s303
          %s305 = sand.u32 %s132, 1
          %s306 = smul.addr %s305, 8
          %s307 = scalar_lea.vmem [#allocation6], %s306
          %308 = dma.done %s304, 128
        $region48: #{tpu_custom_call.1} parent=43 // pred_fallthru
          _
      $region44: #{tpu_custom_call.1} parent=5 // pred_fallthru
        _
    $region6: #{tpu_custom_call.1} parent=1 // loop_footer
      %s20 = sadd.s32 1, %s16
    $region7: #{tpu_custom_call.1} parent=1 // loop_footer_branch
      %15 = sbr.rel target = $region3
    $region8: #{tpu_custom_call.1} parent=1 // loop_exit
      _
    %309 = vsyncpa [#allocation4], 1
    %s310 = scalar_lea.sflag [#allocation4], 1
    %311 = vsyncpa %s310, 1
    %312 = vsyncpa [#allocation5], 1
    %s313 = scalar_lea.sflag [#allocation5], 1
    %314 = vsyncpa %s313, 1

</llo_original>
